<compile_context>
chip_gen: v5e
topology: v5e:2x2
jax: 0.10.0
libtpu: 0.0.40
codegen_flags: <defaults>
</compile_context>

<pallas_src>
import math

import jax
import jax.numpy as jnp
from jax.experimental import pallas as pl
from jax.experimental.pallas import tpu as pltpu

LANES = 128
# 4096 rows x 128 lanes x 4 B = 2 MiB f32 per block buffer. Input + output,
# double-buffered, stays <= 8 MiB: safe on v5e (16 MiB scoped-VMEM default)
# and large enough to sit near the measured ~86% of HBM roofline.
TARGET_ROWS = 4096


def _tolerance_kernel(params_ref, x_ref, o_ref):
    """Elementwise tolerance reward with long_tail sigmoid.

    params (SMEM f32[5]) = [lower, upper, inv_margin, scale, zero_margin_flag]

    value = 1                        if lower <= x <= upper
          = 1 / ((d*scale)^2 + 1)    otherwise, d = dist-to-bounds / margin
          = 0                        otherwise, when margin == 0
    """
    lower = params_ref[0]
    upper = params_ref[1]
    inv_margin = params_ref[2]      # 0.0 when margin == 0 (keeps d finite)
    scale = params_ref[3]
    zero_margin = params_ref[4]     # 1.0 iff margin == 0

    x = x_ref[...].astype(jnp.float32)
    in_bounds = jnp.logical_and(lower <= x, x <= upper)
    d = jnp.where(x < lower, lower - x, x - upper) * inv_margin
    t = d * scale
    # approx=False keeps full precision (1e-6 check vs reference); the kernel
    # is HBM-bound so the EUP approx path would not move wall clock anyway.
    long_tail = pl.reciprocal(t * t + 1.0, approx=False)
    outside = jnp.where(zero_margin > 0.5, 0.0, long_tail)
    o_ref[...] = jnp.where(in_bounds, 1.0, outside).astype(o_ref.dtype)


def _tolerance_jnp(x, lower, upper, margin, scale, out_dtype):
    """Fused single-pass XLA fallback (used only for ragged lane counts)."""
    xf = x.astype(jnp.float32)
    in_bounds = jnp.logical_and(lower <= xf, xf <= upper)
    if margin == 0.0:
        value = jnp.where(in_bounds, 1.0, 0.0)
    else:
        d = jnp.where(xf < lower, lower - xf, xf - upper) * (1.0 / margin)
        value = jnp.where(in_bounds, 1.0, 1.0 / ((d * scale) ** 2 + 1.0))
    return value.astype(out_dtype)


def tolerance_reward(x, *, lower_bound, upper_bound, margin_coef,
                     value_at_margin, sigmoid_="long_tail", output_dtype=None):
    """JAX/Pallas equivalent of ToleranceReward.forward.

    output_dtype=None keeps the torch float32 contract; pass e.g. jnp.bfloat16
    to cut HBM write traffic (~1.5x on large bf16 inputs).
    """
    if lower_bound > upper_bound:
        raise ValueError("Lower bound must be <= upper bound.")
    if margin_coef < 0:
        raise ValueError("`margin` must be non-negative.")
    assert sigmoid_ == "long_tail", "Other sigmoid functions have not been implemented."

    margin = float(margin_coef) * (float(upper_bound) - float(lower_bound))
    if margin != 0.0:
        if not (0.0 < value_at_margin < 1.0):
            raise ValueError("`value_at_margin` must be in (0, 1) when margin != 0.")
        scale = math.sqrt(1.0 / value_at_margin - 1.0)
        inv_margin = 1.0 / margin
    else:
        scale = 0.0
        inv_margin = 0.0

    out_dtype = jnp.float32 if output_dtype is None else jnp.dtype(output_dtype)

    orig_shape = x.shape
    total = x.size
    if total == 0:
        return jnp.zeros(orig_shape, out_dtype)

    if total % LANES != 0:
        # Ragged lane count: any reshuffle to feed the lane-dense kernel
        # (pad+slice or slice+concat) costs full extra HBM passes in the
        # wrapper -- more bytes than the kernel itself moves. A single fused
        # XLA elementwise pass (1 read + 1 write) is the minimal-traffic
        # choice; all 128-divisible sizes (incl. the shipped 2x4x16x16) take
        # the Pallas path below.
        return _tolerance_jnp(x, float(lower_bound), float(upper_bound),
                              margin, scale, out_dtype)

    rows = total // LANES
    x2d = jnp.ravel(x).reshape(rows, LANES)    # view; no extra HBM pass

    # Grid / tile policy: one full-slab block when it fits (no manufactured
    # 2-step split -- v5e/v6e have a single TensorCore and the kernel is
    # HBM-bound, so splitting tiny inputs is pure per-step overhead); large
    # inputs use fixed ~2 MiB blocks, cdiv grid, Pallas masks the edge block.
    tile_rows = rows if rows <= TARGET_ROWS else TARGET_ROWS
    grid = (pl.cdiv(rows, tile_rows),)

    params = jnp.array(
        [float(lower_bound), float(upper_bound), inv_margin, scale,
         1.0 if margin == 0.0 else 0.0],
        dtype=jnp.float32)

    out2d = pl.pallas_call(
        _tolerance_kernel,
        out_shape=jax.ShapeDtypeStruct((rows, LANES), out_dtype),
        grid_spec=pltpu.PrefetchScalarGridSpec(
            num_scalar_prefetch=0,
            grid=grid,
            in_specs=[
                # Small parameter vector lives in SMEM (free scalar reads; no
                # recompile when bounds/margin change between module instances).
                pl.BlockSpec(memory_space=pltpu.MemorySpace.SMEM),
                pl.BlockSpec((tile_rows, LANES), lambda i: (i, 0)),
            ],
            out_specs=pl.BlockSpec((tile_rows, LANES), lambda i: (i, 0)),
        ),
        compiler_params=pltpu.CompilerParams(
            dimension_semantics=("parallel",)),
    )(params, x2d)

    return out2d.reshape(orig_shape)           # view, no extra HBM pass


def _reference(x, lower, upper, margin_coef, value_at_margin):
    """Pure-JAX reference mirroring the PyTorch forward."""
    xf = x.astype(jnp.float32)
    margin = margin_coef * (upper - lower)
    in_bounds = jnp.logical_and(lower <= xf, xf <= upper)
    if margin == 0:
        return jnp.where(in_bounds, 1.0, 0.0)
    scale = math.sqrt(1.0 / value_at_margin - 1.0)
    d = jnp.where(xf < lower, lower - xf, xf - upper) / margin
    return jnp.where(in_bounds, 1.0, 1.0 / ((d * scale) ** 2 + 1.0))


if __name__ == "__main__":
    key = jax.random.PRNGKey(0)
    # Deterministic "init": tolerance parameters (module has no learnable weights).
    lower_bound = -0.5
    upper_bound = 0.5
    margin_coef = 2.0
    value_at_margin = 0.1

    # Small NCHW-ish input, consistent with typical reward-over-feature usage.
    x = jax.random.normal(key, (2, 4, 16, 16), dtype=jnp.float32) * 2.0

    out = jax.block_until_ready(tolerance_reward(
        x, lower_bound=lower_bound, upper_bound=upper_bound,
        margin_coef=margin_coef, value_at_margin=value_at_margin))
    ref = _reference(x, lower_bound, upper_bound, margin_coef, value_at_margin)
    assert out.shape == x.shape and out.dtype == jnp.float32
    assert jnp.allclose(out, ref, atol=1e-6, rtol=1e-6), "mismatch vs reference"

    # margin == 0 branch (same compiled kernel; only the SMEM params change).
    out0 = jax.block_until_ready(tolerance_reward(
        x, lower_bound=lower_bound, upper_bound=upper_bound,
        margin_coef=0.0, value_at_margin=value_at_margin))
    ref0 = _reference(x, lower_bound, upper_bound, 0.0, value_at_margin)
    assert jnp.allclose(out0, ref0), "mismatch vs reference (margin=0)"

    # Native bf16 input path (no wrapper cast; kernel casts to f32 internally).
    xb = x.astype(jnp.bfloat16)
    outb = jax.block_until_ready(tolerance_reward(
        xb, lower_bound=lower_bound, upper_bound=upper_bound,
        margin_coef=margin_coef, value_at_margin=value_at_margin))
    refb = _reference(xb, lower_bound, upper_bound, margin_coef, value_at_margin)
    assert outb.dtype == jnp.float32
    assert jnp.allclose(outb, refb, atol=1e-5, rtol=1e-5), "mismatch (bf16 in)"

    # Opt-in bf16 output (halves write traffic; off by default to keep the
    # torch float32 contract).
    outb16 = jax.block_until_ready(tolerance_reward(
        xb, lower_bound=lower_bound, upper_bound=upper_bound,
        margin_coef=margin_coef, value_at_margin=value_at_margin,
        output_dtype=jnp.bfloat16))
    assert outb16.dtype == jnp.bfloat16
    assert jnp.allclose(outb16.astype(jnp.float32), refb,
                        atol=1e-2, rtol=1e-2), "mismatch (bf16 out)"

    # Ragged size (not a multiple of 128): minimal-traffic fused XLA path.
    xr = jax.random.normal(jax.random.PRNGKey(1), (3, 5, 7), dtype=jnp.float32)
    outr = jax.block_until_ready(tolerance_reward(
        xr, lower_bound=lower_bound, upper_bound=upper_bound,
        margin_coef=margin_coef, value_at_margin=value_at_margin))
    refr = _reference(xr, lower_bound, upper_bound, margin_coef, value_at_margin)
    assert jnp.allclose(outr, refr, atol=1e-6, rtol=1e-6), "mismatch (ragged)"

    print("KERNEL_OK")
</pallas_src>

<mosaic_0001>
module attributes {stable_mosaic.version = 11 : i64} {
  func.func @_tolerance_kernel(%arg0: i32, %arg1: memref<5xf32, #tpu.memory_space<smem>>, %arg2: memref<16x128xf32, #tpu.memory_space<vmem>>, %arg3: memref<16x128xf32, #tpu.memory_space<vmem>>) attributes {dimension_semantics = [#tpu.dimension_semantics<parallel>], iteration_bounds = array<i64: 1>, scalar_prefetch = 0 : i64, scratch_operands = 0 : i64, tpu.core_type = #tpu.core_type<tc>, window_params = [{transform_indices = @transform_0, window_bounds = array<i64: 5>}, {transform_indices = @transform_1, window_bounds = array<i64: 16, 128>}, {transform_indices = @transform_2, window_bounds = array<i64: 16, 128>}]} {
    %c0 = arith.constant 0 : index
    %0 = memref.load %arg1[%c0] : memref<5xf32, #tpu.memory_space<smem>>
    %c1 = arith.constant 1 : index
    %1 = memref.load %arg1[%c1] : memref<5xf32, #tpu.memory_space<smem>>
    %c2 = arith.constant 2 : index
    %2 = memref.load %arg1[%c2] : memref<5xf32, #tpu.memory_space<smem>>
    %c3 = arith.constant 3 : index
    %3 = memref.load %arg1[%c3] : memref<5xf32, #tpu.memory_space<smem>>
    %c4 = arith.constant 4 : index
    %4 = memref.load %arg1[%c4] : memref<5xf32, #tpu.memory_space<smem>>
    %c0_0 = arith.constant 0 : index
    %c0_1 = arith.constant 0 : index
    %5 = vector.load %arg2[%c0_0, %c0_1] : memref<16x128xf32, #tpu.memory_space<vmem>>, vector<16x128xf32>
    %6 = vector.broadcast %0 : f32 to vector<16x128xf32>
    %7 = arith.cmpf ole, %6, %5 : vector<16x128xf32>
    %8 = vector.broadcast %1 : f32 to vector<16x128xf32>
    %9 = arith.cmpf ole, %5, %8 : vector<16x128xf32>
    %10 = arith.andi %7, %9 : vector<16x128xi1>
    %11 = vector.broadcast %0 : f32 to vector<16x128xf32>
    %12 = arith.cmpf olt, %5, %11 : vector<16x128xf32>
    %13 = vector.broadcast %0 : f32 to vector<16x128xf32>
    %14 = arith.subf %13, %5 : vector<16x128xf32>
    %15 = vector.broadcast %1 : f32 to vector<16x128xf32>
    %16 = arith.subf %5, %15 : vector<16x128xf32>
    %17 = arith.select %12, %14, %16 : vector<16x128xi1>, vector<16x128xf32>
    %18 = vector.broadcast %2 : f32 to vector<16x128xf32>
    %19 = arith.mulf %17, %18 : vector<16x128xf32>
    %20 = vector.broadcast %3 : f32 to vector<16x128xf32>
    %21 = arith.mulf %19, %20 : vector<16x128xf32>
    %22 = arith.mulf %21, %21 : vector<16x128xf32>
    %cst = arith.constant 1.000000e+00 : f32
    %23 = vector.broadcast %cst : f32 to vector<16x128xf32>
    %24 = arith.addf %22, %23 : vector<16x128xf32>
    %25 = tpu.reciprocal %24 : vector<16x128xf32> -> vector<16x128xf32>
    %cst_2 = arith.constant 5.000000e-01 : f32
    %26 = arith.cmpf ogt, %4, %cst_2 : f32
    %cst_3 = arith.constant 0.000000e+00 : f32
    %27 = vector.broadcast %cst_3 : f32 to vector<16x128xf32>
    %28 = arith.select %26, %27, %25 : vector<16x128xf32>
    %cst_4 = arith.constant 1.000000e+00 : f32
    %29 = vector.broadcast %cst_4 : f32 to vector<16x128xf32>
    %30 = arith.select %10, %29, %28 : vector<16x128xi1>, vector<16x128xf32>
    %c0_5 = arith.constant 0 : index
    %c0_6 = arith.constant 0 : index
    %31 = vector.load %arg3[%c0_5, %c0_6] : memref<16x128xf32, #tpu.memory_space<vmem>>, vector<16x128xf32>
    tpu.vector_store %arg3[%c0_5, %c0_6], %30 {strides = array<i32>} : memref<16x128xf32, #tpu.memory_space<vmem>>, vector<16x128xf32>,
    return
  }
  func.func @transform_0(%arg0: i32) -> i32 {
    %c0_i32 = arith.constant 0 : i32
    %c0_i32_0 = arith.constant 0 : i32
    return %c0_i32 : i32
  }
  func.func @transform_1(%arg0: i32) -> (i32, i32) {
    %c0_i32 = arith.constant 0 : i32
    %c0_i32_0 = arith.constant 0 : i32
    return %arg0, %c0_i32 : i32, i32
  }
  func.func @transform_2(%arg0: i32) -> (i32, i32) {
    %c0_i32 = arith.constant 0 : i32
    %c0_i32_0 = arith.constant 0 : i32
    return %arg0, %c0_i32 : i32, i32
  }
}

</mosaic_0001>

<llo_original>
// kernel: tpu_custom_call.1
$region0: #{tpu_custom_call.1}
  #allocation0 [shape = 'u32[]', space=smem, size = 0x4, offset = 0x4, fixed_abs, tag = 'smem constant byte address 0x4 - core index']
  #allocation1 [shape = 'u32[72,128]{1,0:T(1,128)}', space=vmem, size = 0x9000, scoped, tag = 'internal scratch']
  %s0 = inlined_call_operand.hbm [shape: f32[5], index: 0, kind: input, shape index: {}]
  %s1 = inlined_call_operand.hbm [shape: f32[16,128], index: 1, kind: input, shape index: {}]
  %s2 = inlined_call_operand.hbm [shape: f32[16,128], index: 2, kind: output, shape index: {}]
  %s3 = sld [smem:[#allocation0]]
  $region26: #{tpu_custom_call.1} parent=0
    _
  %s5 = ssub.s32 1, %s3
  %s6 = scalar_select 0, %s5, %s3
  $region1: #{tpu_custom_call.1} parent=0
    #allocation2 [shape = 'u8[512]{0}', space=smem, size = 0x200, scoped, tag = 'input window, operand 0, single buffered']
    #allocation3 [shape = 's32[1]{0}', space=sflag, size = 0x4, scoped, tag = 'scoped memory for tpu_custom_call.1']
    #allocation4 [shape = 's32[1]{0}', space=sflag, size = 0x4, scoped, tag = 'scoped memory for tpu_custom_call.1']
    #allocation5 [shape = 's32[1]{0}', space=sflag, size = 0x4, scoped, tag = 'scoped memory for tpu_custom_call.1']
    #allocation6 [shape = 'u8[8192]{0}', space=vmem, size = 0x2000, scoped, tag = 'input window, operand 1, single buffered']
    #allocation7 [shape = 'u8[8192]{0}', space=vmem, size = 0x2000, scoped, tag = 'output window, operand 0, single buffered']
    %7 = vsyncpa [#allocation5], 0
    %8 = vsyncpa [#allocation3], 0
    %9 = vsyncpa [#allocation4], 0
    // Predicated region
    $region2: #{tpu_custom_call.1} parent=1 // pred_check
      _
    $region3: #{tpu_custom_call.1} parent=1 // pred_check_branch
      %11 = sbr.rel (0) target = $region5
    $region4: #{tpu_custom_call.1} parent=1 // pred_region
      %13 = vsyncadd [#allocation5], 0
      %s15 = sshll.u32 %s0, 4
      %s16 = int_to_ptr.hbm [resolvable:$true] %s15
      %18 = dma.hbm_to_smem %s16, 16, [#allocation2], [#allocation5]
    $region5: #{tpu_custom_call.1} parent=1 // pred_fallthru
      _
    // Predicated region
    $region6: #{tpu_custom_call.1} parent=1 // pred_check
      _
    $region7: #{tpu_custom_call.1} parent=1 // pred_check_branch
      %20 = sbr.rel (0) target = $region9
    $region8: #{tpu_custom_call.1} parent=1 // pred_region
      %22 = vsyncadd [#allocation3], 0
      %s23 = sshll.u32 %s1, 4
      %s24 = int_to_ptr.hbm [resolvable:$true] %s23
      %s25 = sshll.u32 [#allocation6], 4
      %s26 = int_to_ptr.vmem [resolvable:$true] %s25
      %31 = dma.hbm_to_vmem [thread:$0]  %s24, 256, %s26, [#allocation3], 128, 128, 8
    $region9: #{tpu_custom_call.1} parent=1 // pred_fallthru
      _
    // Predicated region
    $region10: #{tpu_custom_call.1} parent=1 // pred_check
      _
    $region11: #{tpu_custom_call.1} parent=1 // pred_check_branch
      %33 = sbr.rel (0) target = $region13
    $region12: #{tpu_custom_call.1} parent=1 // pred_region
      %35 = dma.done [#allocation5], 16
    $region13: #{tpu_custom_call.1} parent=1 // pred_fallthru
      _
    // Predicated region
    $region14: #{tpu_custom_call.1} parent=1 // pred_check
      _
    $region15: #{tpu_custom_call.1} parent=1 // pred_check_branch
      %37 = sbr.rel (0) target = $region17
    $region16: #{tpu_custom_call.1} parent=1 // pred_region
      %39 = dma.done [#allocation3], 256
    $region17: #{tpu_custom_call.1} parent=1 // pred_fallthru
      _
    %40 = sfence
    %s41 = sld [smem:[#allocation2]]
    %s42 = sld [smem:[#allocation2 + $0x1]]
    %s43 = sld [smem:[#allocation2 + $0x2]]
    %s44 = sld [smem:[#allocation2 + $0x3]]
    %s45 = sld [smem:[#allocation2 + $0x4]]
    %v46 = vld [vmem:[#allocation6] sm:$0xff]
    %v47 = vld [vmem:[#allocation6 + $0x8] sm:$0xff]
    %v48 = vstv %s41
    %vm49 = vcmp.le.f32.partialorder %v48, %v46
    %vm50 = vcmp.le.f32.partialorder %v48, %v47
    %v51 = vstv %s42
    %vm52 = vcmp.le.f32.partialorder %v46, %v51
    %vm53 = vcmp.le.f32.partialorder %v47, %v51
    %vm54 = vmand %vm49, %vm52
    %vm55 = vmand %vm50, %vm53
    %vm56 = vcmp.lt.f32.partialorder %v46, %v48
    %vm57 = vcmp.lt.f32.partialorder %v47, %v48
    %v58 = vsub.f32 %v48, %v46
    %v59 = vsub.f32 %v48, %v47
    %v60 = vsub.f32 %v46, %v51
    %v61 = vsub.f32 %v47, %v51
    %v62 = vsel %vm56, %v58, %v60
    %v63 = vsel %vm57, %v59, %v61
    %v64 = vstv %s43
    %v65 = vmul.f32 %v62, %v64
    %v66 = vmul.f32 %v63, %v64
    %v67 = vstv %s44
    %v68 = vmul.f32 %v65, %v67
    %v69 = vmul.f32 %v66, %v67
    %v70 = vmul.f32 %v68, %v68
    %v71 = vmul.f32 %v69, %v69
    %v72 = vadd.f32 %v70, 1.0
    %v73 = vadd.f32 %v71, 1.0
    %v74 = vrcp.pop %v72
    %v75 = vmul.f32 %v72, %v74
    %v76 = vsub.f32 1.0, %v75
    %v77 = vmul.f32 %v74, %v76
    %v78 = vadd.f32 %v74, %v77
    %vm79 = vweird.f32 %v72
    %vm80 = vweird.f32 %v74
    %vm81 = vmor %vm79, %vm80
    %v82 = vsel %vm81, %v74, %v78
    %v83 = vand.u32 2147483647, %v72
    %vm84 = vcmp.eq.f32.partialorder %v83, 8.507059e+37
    %v85 = vand.u32 %v72, 2147483648
    %v86 = vor.u32 1.1754944e-38, %v85
    %v87 = vsel %vm84, %v86, %v82
    %v88 = vrcp.pop %v73
    %v89 = vmul.f32 %v73, %v88
    %v90 = vsub.f32 1.0, %v89
    %v91 = vmul.f32 %v88, %v90
    %v92 = vadd.f32 %v88, %v91
    %vm93 = vweird.f32 %v73
    %vm94 = vweird.f32 %v88
    %vm95 = vmor %vm93, %vm94
    %v96 = vsel %vm95, %v88, %v92
    %v97 = vand.u32 2147483647, %v73
    %vm98 = vcmp.eq.f32.partialorder %v97, 8.507059e+37
    %v99 = vand.u32 %v73, 2147483648
    %v100 = vor.u32 1.1754944e-38, %v99
    %v101 = vsel %vm98, %v100, %v96
    %p102 = scmp.gt.f32.partialorder %s45, 0.5
    %s103 = scalar_select %p102, 1, 0
    %v104 = vstv %s103
    %vm105 = vcmp.eq.s32.totalorder %v104, 1
    %v106 = vsel %vm105, 0.0, %v87
    %v107 = vsel %vm105, 0.0, %v101
    %v108 = vsel %vm54, 1.0, %v106
    %v109 = vsel %vm55, 1.0, %v107
    %110 = vst [vmem:[#allocation7] sm:$0xff] %v108
    %111 = vst [vmem:[#allocation7 + $0x8] sm:$0xff] %v109
    // Predicated region
    $region18: #{tpu_custom_call.1} parent=1 // pred_check
      _
    $region19: #{tpu_custom_call.1} parent=1 // pred_check_branch
      %113 = sbr.rel (0) target = $region21
    $region20: #{tpu_custom_call.1} parent=1 // pred_region
      %115 = vsyncadd [#allocation4], 0
      %s116 = sshll.u32 [#allocation7], 4
      %s117 = int_to_ptr.vmem [resolvable:$true] %s116
      %s118 = sshll.u32 %s2, 4
      %s119 = int_to_ptr.hbm [resolvable:$true] %s118
      %124 = dma.vmem_to_hbm [thread:$0]  %s117, 256, %s119, [#allocation4], 128, 128, 8
    $region21: #{tpu_custom_call.1} parent=1 // pred_fallthru
      _
    // Predicated region
    $region22: #{tpu_custom_call.1} parent=1 // pred_check
      _
    $region23: #{tpu_custom_call.1} parent=1 // pred_check_branch
      %126 = sbr.rel (0) target = $region25
    $region24: #{tpu_custom_call.1} parent=1 // pred_region
      %128 = dma.done [#allocation4], 256
    $region25: #{tpu_custom_call.1} parent=1 // pred_fallthru
      _
    %129 = vsyncpa [#allocation3], 1
    %130 = vsyncpa [#allocation4], 1
    %131 = vsyncpa [#allocation5], 1

</llo_original>
